<compile_context>
chip_gen: v7x
topology: tpu7x:2x2x1
jax: 0.10.0
libtpu: 0.0.40
codegen_flags: <defaults>
</compile_context>

<pallas_src>
import jax
import jax.numpy as jnp
from jax.experimental import pallas as pl
from jax.experimental.pallas import tpu as pltpu


def stream_kernel(x_ref, w1_ref, aux_ref, b2_ref, wf_ref, att_ref):
    # x_ref:   (b_blk*S, F)  flattened batch*segment rows for this batch block (VMEM)
    # w1_ref:  (F, H)        fc1 weight, pre-transposed (VMEM, resident)
    # aux_ref: (2, H)        row 0 = fc1 bias, row 1 = fc2 weight row (VMEM, resident)
    # b2_ref:  (1,)          fc2 bias scalar (SMEM)
    # wf_ref:  (b_blk, F)    weighted_features output (lane-dense, no degenerate dims)
    # att_ref: (b_blk, S)    attention output, lane-dense (segments along lanes)
    b_blk, seg = att_ref.shape
    feat = wf_ref.shape[1]
    hid = w1_ref.shape[1]

    x = x_ref[...]                                   # (n_rows, F)
    aux = aux_ref[...]                               # (2, H)
    b1 = aux[0:1, :]                                 # (1, H)
    w2 = aux[1:2, :]                                 # (1, H)
    b2 = b2_ref[0]                                   # scalar

    # fc1 + ReLU: one tall MXU matmul for the whole batch block, f32 accumulation.
    # (v6e/v7x option: cast x and w1_ref[...] to bf16 here, keep f32 accumulation.)
    h = jnp.dot(x, w1_ref[...], preferred_element_type=jnp.float32)   # (n_rows, H)
    h = jnp.maximum(h + b1, 0.0)

    # fc2 (output width 1) as an XLU lane reduction — no degenerate N=1 matmul.
    hw = h * w2                                                        # (n_rows, H)

    # Per-row attention scalar used to weight the features.
    logit_col = jnp.sum(hw, axis=-1, keepdims=True)                    # (n_rows, 1)
    a_col = jax.nn.sigmoid(logit_col + b2)                             # (n_rows, 1)

    # weighted_features: segment sum via a layout-preserving reshape (S == 8 == f32
    # sublane tile) and a sublane reduce — O(b_blk*S*F), no selector matmul.
    weighted = x * a_col                                               # (n_rows, F)
    wf = jnp.sum(weighted.reshape(b_blk, seg, feat), axis=1)           # (b_blk, F)
    wf_ref[...] = wf.astype(wf_ref.dtype)

    # Lane-dense attention block: same reduction done in (b_blk, S, H) layout so the
    # result lands directly as (b_blk, S) with segments on the lane axis.
    logit_row = jnp.sum(hw.reshape(b_blk, seg, hid), axis=-1)          # (b_blk, S)
    att_ref[...] = jax.nn.sigmoid(logit_row + b2).astype(att_ref.dtype)


def _choose_batch_block(B, S, F, H, vmem_budget_bytes=12 << 20):
    """Pick how many batch elements to process per grid step.

    The budget (~12 MiB) keeps the per-step working set under every generation's
    default scoped VMEM (v5e 16 MiB, v6e 32 MiB, v7x 32 MiB of 64 MiB physical per TC),
    counting double-buffered DMA tiles AND the in-kernel intermediates.
    """
    f32 = 4
    # Resident weight tiles (double-buffered by the pipeline).
    fixed = f32 * (F * H + 2 * H + 8) * 2
    # Per batch element:
    #   DMA'd tiles, double-buffered: x rows (S*F), wf row (F), att row (S)
    #   in-kernel intermediates, single-buffered: h + h*w2 (2*S*H), weighted (S*F),
    #   small per-row logits (~2*S).
    per_batch = f32 * ((S * F + F + S) * 2 + (2 * S * H + S * F + 2 * S))
    cap = max(1, (vmem_budget_bytes - fixed) // per_batch)

    if B * S < 512 and B <= cap:
        # Small problem: one grid step; output block == full array dims (always legal).
        return B

    # Large problem: multiple-of-8 blocks, target ~1024 rows per step (>=256 for MXU
    # depth, a few hundred KiB per tile), and keep >= 2 blocks so the "parallel" grid
    # axis can shard across v7x's two TensorCores.
    target = max(pl.cdiv(256, S), 8) * 4
    blk = min(cap, pl.cdiv(B, 2), target)
    blk = max(8, (blk // 8) * 8)
    return blk


def stream_module_forward(x, w1, b1, w2, b2, *, batch_block=None):
    """Pallas implementation of StreamModule.forward.

    x:  (B, S, F) float32
    w1: (F, H)    fc1 weight (already transposed vs. torch's (H, F))
    b1: (H,)
    w2: (H, 1)    fc2 weight (already transposed vs. torch's (1, H))
    b2: (1,)
    Returns (weighted_features (B, F), attention (B, S, 1)).
    """
    B, S, F = x.shape
    H = w1.shape[1]

    if batch_block is None:
        batch_block = _choose_batch_block(B, S, F, H)
    n_blocks = pl.cdiv(B, batch_block)
    B_pad = n_blocks * batch_block
    rows_per_block = batch_block * S

    # Flatten batch*segments in the wrapper (free layout plumbing) so fc1 sees one tall
    # (rows_per_block, F) LHS per step.  Pad the batch up to a whole number of blocks
    # (pad rows contribute 0 to weighted_features and are sliced off the outputs).
    x2d = x.reshape(B * S, F)
    if B_pad != B:
        x2d = jnp.pad(x2d, ((0, (B_pad - B) * S), (0, 0)))

    aux = jnp.concatenate([b1.reshape(1, H), w2.reshape(1, H)], axis=0)  # (2, H)
    b2_1d = b2.reshape(1)

    out_shapes = (
        jax.ShapeDtypeStruct((B_pad, F), x.dtype),   # weighted_features, directly 2-D
        jax.ShapeDtypeStruct((B_pad, S), x.dtype),   # attention, lane-dense
    )

    wf, att2d = pl.pallas_call(
        stream_kernel,
        out_shape=out_shapes,
        grid_spec=pltpu.PrefetchScalarGridSpec(
            num_scalar_prefetch=0,
            grid=(n_blocks,),
            in_specs=[
                pl.BlockSpec((rows_per_block, F), lambda i: (i, 0)),       # x rows
                pl.BlockSpec((F, H), lambda i: (0, 0)),                    # w1 (resident)
                pl.BlockSpec((2, H), lambda i: (0, 0)),                    # [b1; w2 row]
                pl.BlockSpec(memory_space=pltpu.MemorySpace.SMEM),         # b2 scalar
            ],
            out_specs=[
                pl.BlockSpec((batch_block, F), lambda i: (i, 0)),
                pl.BlockSpec((batch_block, S), lambda i: (i, 0)),
            ],
        ),
        compiler_params=pltpu.CompilerParams(
            # Batch-block axis is independent: lets v7x's 2 TCs split the grid when
            # n_blocks >= 2; near-neutral (and harmless) on v5e/v6e.
            dimension_semantics=("parallel",),
        ),
    )(x2d, w1, aux, b2_1d)

    if B_pad != B:
        wf = wf[:B]
        att2d = att2d[:B]

    # (B, S) -> (B, S, 1) preserves element order: a free bit-reshape outside the kernel.
    return wf, att2d.reshape(B, S, 1)


def ref_forward(x, w1, b1, w2, b2):
    # Pure-JAX reference matching the PyTorch module.
    h = jnp.maximum(jnp.einsum("bsf,fh->bsh", x, w1) + b1, 0.0)
    a = jax.nn.sigmoid(jnp.einsum("bsh,ho->bso", h, w2) + b2)        # (B, S, 1)
    wf = jnp.sum(x * a, axis=1)                                      # (B, F)
    return wf, a


def _make_params(key, F, H):
    k1, k2, k3, k4 = jax.random.split(key, 4)
    w1 = jax.random.normal(k1, (F, H), dtype=jnp.float32) * (1.0 / jnp.sqrt(F))
    b1 = jax.random.normal(k2, (H,), dtype=jnp.float32) * 0.01
    w2 = jax.random.normal(k3, (H, 1), dtype=jnp.float32) * (1.0 / jnp.sqrt(H))
    b2 = jax.random.normal(k4, (1,), dtype=jnp.float32) * 0.01
    return w1, b1, w2, b2


if __name__ == "__main__":
    S, F, H = 8, 32, 256          # num_segments, feature_size, fc1 hidden
    key = jax.random.PRNGKey(0)
    kp, kx1, kx2 = jax.random.split(key, 3)
    w1, b1, w2, b2 = _make_params(kp, F, H)

    # --- default small shape: single grid step, block == full array ---
    B = 2
    x = jax.random.normal(kx1, (B, S, F), dtype=jnp.float32)
    wf, att = stream_module_forward(x, w1, b1, w2, b2)
    jax.block_until_ready((wf, att))
    wf_ref, att_ref = ref_forward(x, w1, b1, w2, b2)
    assert wf.shape == (B, F) and att.shape == (B, S, 1)
    assert jnp.allclose(wf, wf_ref, atol=1e-4, rtol=1e-4)
    assert jnp.allclose(att, att_ref, atol=1e-4, rtol=1e-4)

    # --- multi-block path with batch padding (B not a multiple of the block) ---
    B2 = 20
    x2 = jax.random.normal(kx2, (B2, S, F), dtype=jnp.float32)
    wf2, att2 = stream_module_forward(x2, w1, b1, w2, b2, batch_block=8)
    jax.block_until_ready((wf2, att2))
    wf2_ref, att2_ref = ref_forward(x2, w1, b1, w2, b2)
    assert wf2.shape == (B2, F) and att2.shape == (B2, S, 1)
    assert jnp.allclose(wf2, wf2_ref, atol=1e-4, rtol=1e-4)
    assert jnp.allclose(att2, att2_ref, atol=1e-4, rtol=1e-4)

    print("KERNEL_OK")
</pallas_src>

<mosaic_0001>
module attributes {stable_mosaic.version = 11 : i64} {
  func.func @stream_kernel(%arg0: i32, %arg1: memref<16x32xf32, #tpu.memory_space<vmem>>, %arg2: memref<32x256xf32, #tpu.memory_space<vmem>>, %arg3: memref<2x256xf32, #tpu.memory_space<vmem>>, %arg4: memref<1xf32, #tpu.memory_space<smem>>, %arg5: memref<2x32xf32, #tpu.memory_space<vmem>>, %arg6: memref<2x8xf32, #tpu.memory_space<vmem>>) attributes {dimension_semantics = [#tpu.dimension_semantics<parallel>], iteration_bounds = array<i64: 1>, scalar_prefetch = 0 : i64, scratch_operands = 0 : i64, tpu.core_type = #tpu.core_type<tc>, window_params = [{transform_indices = @transform_0, window_bounds = array<i64: 16, 32>}, {pipeline_mode = #tpu.pipeline_mode<synchronous>, transform_indices = @transform_1, window_bounds = array<i64: 32, 256>}, {pipeline_mode = #tpu.pipeline_mode<synchronous>, transform_indices = @transform_2, window_bounds = array<i64: 2, 256>}, {transform_indices = @transform_3, window_bounds = array<i64: 1>}, {transform_indices = @transform_4, window_bounds = array<i64: 2, 32>}, {transform_indices = @transform_5, window_bounds = array<i64: 2, 8>}]} {
    %c0 = arith.constant 0 : index
    %c0_0 = arith.constant 0 : index
    %0 = vector.load %arg1[%c0, %c0_0] : memref<16x32xf32, #tpu.memory_space<vmem>>, vector<16x32xf32>
    %c0_1 = arith.constant 0 : index
    %c0_2 = arith.constant 0 : index
    %1 = vector.load %arg3[%c0_1, %c0_2] : memref<2x256xf32, #tpu.memory_space<vmem>>, vector<2x256xf32>
    %2 = vector.extract_strided_slice %1 {offsets = [0, 0], sizes = [1, 256], strides = [1, 1]} : vector<2x256xf32> to vector<1x256xf32>
    %3 = vector.extract_strided_slice %1 {offsets = [1, 0], sizes = [1, 256], strides = [1, 1]} : vector<2x256xf32> to vector<1x256xf32>
    %c0_3 = arith.constant 0 : index
    %4 = memref.load %arg4[%c0_3] : memref<1xf32, #tpu.memory_space<smem>>
    %c0_4 = arith.constant 0 : index
    %c0_5 = arith.constant 0 : index
    %5 = vector.load %arg2[%c0_4, %c0_5] : memref<32x256xf32, #tpu.memory_space<vmem>>, vector<32x256xf32>
    %cst = arith.constant dense<0.000000e+00> : vector<16x256xf32>
    %6 = tpu.matmul %0, %5, %cst {dimension_numbers = #tpu.dot_dimension_numbers<[1], [0], [0], [1], [0, 0, 1, 1], [], []>} : vector<16x32xf32>, vector<32x256xf32>, vector<16x256xf32> -> vector<16x256xf32>
    %7 = vector.broadcast %2 : vector<1x256xf32> to vector<16x256xf32>
    %8 = arith.addf %6, %7 : vector<16x256xf32>
    %cst_6 = arith.constant 0.000000e+00 : f32
    %9 = vector.broadcast %cst_6 : f32 to vector<16x256xf32>
    %10 = arith.maximumf %8, %9 : vector<16x256xf32>
    %11 = vector.broadcast %3 : vector<1x256xf32> to vector<16x256xf32>
    %12 = arith.mulf %10, %11 : vector<16x256xf32>
    %cst_7 = arith.constant dense<0.000000e+00> : vector<16xf32>
    %13 = vector.multi_reduction <add>, %12, %cst_7 [1] : vector<16x256xf32> to vector<16xf32>
    %14 = vector.shape_cast %13 : vector<16xf32> to vector<16x1xf32>
    %15 = vector.broadcast %4 : f32 to vector<16x1xf32>
    %16 = arith.addf %14, %15 : vector<16x1xf32>
    %17 = arith.negf %16 : vector<16x1xf32>
    %18 = math.exp %17 : vector<16x1xf32>
    %cst_8 = arith.constant 1.000000e+00 : f32
    %19 = vector.broadcast %cst_8 : f32 to vector<16x1xf32>
    %20 = arith.addf %19, %18 : vector<16x1xf32>
    %21 = arith.divf %19, %20 : vector<16x1xf32>
    %22 = vector.broadcast %21 : vector<16x1xf32> to vector<16x32xf32>
    %23 = arith.mulf %0, %22 : vector<16x32xf32>
    %24 = vector.shape_cast %23 : vector<16x32xf32> to vector<2x8x32xf32>
    %cst_9 = arith.constant dense<0.000000e+00> : vector<2x32xf32>
    %25 = vector.multi_reduction <add>, %24, %cst_9 [1] : vector<2x8x32xf32> to vector<2x32xf32>
    %c0_10 = arith.constant 0 : index
    %c0_11 = arith.constant 0 : index
    %26 = vector.load %arg5[%c0_10, %c0_11] : memref<2x32xf32, #tpu.memory_space<vmem>>, vector<2x32xf32>
    tpu.vector_store %arg5[%c0_10, %c0_11], %25 {strides = array<i32>} : memref<2x32xf32, #tpu.memory_space<vmem>>, vector<2x32xf32>,
    %27 = vector.shape_cast %12 : vector<16x256xf32> to vector<2x8x256xf32>
    %cst_12 = arith.constant dense<0.000000e+00> : vector<2x8xf32>
    %28 = vector.multi_reduction <add>, %27, %cst_12 [2] : vector<2x8x256xf32> to vector<2x8xf32>
    %29 = vector.broadcast %4 : f32 to vector<2x8xf32>
    %30 = arith.addf %28, %29 : vector<2x8xf32>
    %31 = arith.negf %30 : vector<2x8xf32>
    %32 = math.exp %31 : vector<2x8xf32>
    %cst_13 = arith.constant 1.000000e+00 : f32
    %33 = vector.broadcast %cst_13 : f32 to vector<2x8xf32>
    %34 = arith.addf %33, %32 : vector<2x8xf32>
    %35 = arith.divf %33, %34 : vector<2x8xf32>
    %c0_14 = arith.constant 0 : index
    %c0_15 = arith.constant 0 : index
    %36 = vector.load %arg6[%c0_14, %c0_15] : memref<2x8xf32, #tpu.memory_space<vmem>>, vector<2x8xf32>
    tpu.vector_store %arg6[%c0_14, %c0_15], %35 {strides = array<i32>} : memref<2x8xf32, #tpu.memory_space<vmem>>, vector<2x8xf32>,
    return
  }
  func.func @transform_0(%arg0: i32) -> (i32, i32) {
    %c0_i32 = arith.constant 0 : i32
    %c0_i32_0 = arith.constant 0 : i32
    return %arg0, %c0_i32 : i32, i32
  }
  func.func @transform_1(%arg0: i32) -> (i32, i32) {
    %c0_i32 = arith.constant 0 : i32
    %c0_i32_0 = arith.constant 0 : i32
    %c0_i32_1 = arith.constant 0 : i32
    return %c0_i32, %c0_i32_0 : i32, i32
  }
  func.func @transform_2(%arg0: i32) -> (i32, i32) {
    %c0_i32 = arith.constant 0 : i32
    %c0_i32_0 = arith.constant 0 : i32
    %c0_i32_1 = arith.constant 0 : i32
    return %c0_i32, %c0_i32_0 : i32, i32
  }
  func.func @transform_3(%arg0: i32) -> i32 {
    %c0_i32 = arith.constant 0 : i32
    %c0_i32_0 = arith.constant 0 : i32
    return %c0_i32 : i32
  }
  func.func @transform_4(%arg0: i32) -> (i32, i32) {
    %c0_i32 = arith.constant 0 : i32
    %c0_i32_0 = arith.constant 0 : i32
    return %arg0, %c0_i32 : i32, i32
  }
  func.func @transform_5(%arg0: i32) -> (i32, i32) {
    %c0_i32 = arith.constant 0 : i32
    %c0_i32_0 = arith.constant 0 : i32
    return %arg0, %c0_i32 : i32, i32
  }
}

</mosaic_0001>

<llo_original>
// kernel: tpu_custom_call.1
$region0: #{tpu_custom_call.1}
  #allocation0 [shape = 'u32[]', space=smem, size = 0x4, offset = 0x4, fixed_abs, tag = 'smem constant byte address 0x4 - core index']
  #allocation1 [shape = 'u32[144,128]{1,0:T(1,128)}', space=vmem, size = 0x12000, scoped, tag = 'internal scratch']
  #allocation2 [shape = 'f32[1]{0:T(128)S(6)}', space=smem, size = 0x200, scoped, tag = 'scoped memory for tpu_custom_call.1']
  %s0 = inlined_call_operand.hbm [shape: f32[16,32], index: 0, kind: input, shape index: {}]
  %s1 = inlined_call_operand.hbm [shape: f32[32,256], index: 1, kind: input, shape index: {}]
  %s2 = inlined_call_operand.vmem [shape: f32[2,256], index: 2, kind: input, shape index: {}]
  %s3 = inlined_call_operand.<no memory space> [shape: f32[1], index: 3, kind: input, shape index: {}]
  %s4 = inlined_call_operand.hbm [shape: f32[2,32], index: 4, kind: output, shape index: {0}]
  %s5 = inlined_call_operand.hbm [shape: f32[2,8], index: 5, kind: output, shape index: {1}]
  %6 = xla_tuple %s4, %s5
  %s7 = sld [smem:[#allocation0]]
  $region42: #{tpu_custom_call.1} parent=0
    _
  %s9 = ssub.s32 1, %s7
  %s10 = scalar_select 0, %s9, %s7
  %11 = sst [smem:[#allocation2]] %s3
  $region1: #{tpu_custom_call.1} parent=0
    #allocation3 [shape = 'u8[8192]{0}', space=vmem, size = 0x2000, scoped, tag = 'input window, operand 0, single buffered']
    #allocation4 [shape = 's32[1]{0}', space=sflag, size = 0x4, scoped, tag = 'scoped memory for tpu_custom_call.1']
    #allocation5 [shape = 's32[1]{0}', space=sflag, size = 0x4, scoped, tag = 'scoped memory for tpu_custom_call.1']
    #allocation6 [shape = 'u8[32768]{0}', space=vmem, size = 0x8000, scoped, tag = 'input window, operand 1, single buffered']
    #allocation7 [shape = 's32[1]{0}', space=sflag, size = 0x4, scoped, tag = 'scoped memory for tpu_custom_call.1']
    #allocation8 [shape = 'u8[1024]{0}', space=vmem, size = 0x400, scoped, tag = 'output window, operand 0, single buffered']
    #allocation9 [shape = 'u8[1024]{0}', space=vmem, size = 0x400, scoped, tag = 'output window, operand 1, single buffered']
    #allocation10 [shape = 's32[1]{0}', space=sflag, size = 0x4, scoped, tag = 'scoped memory for tpu_custom_call.1']
    %12 = vsyncpa [#allocation4], 0
    %13 = vsyncpa [#allocation7], 0
    %14 = vsyncpa [#allocation5], 0
    %15 = vsyncpa [#allocation10], 0
    // Predicated region
    $region2: #{tpu_custom_call.1} parent=1 // pred_check
      _
    $region3: #{tpu_custom_call.1} parent=1 // pred_check_branch
      %17 = sbr.rel (0) target = $region5
    $region4: #{tpu_custom_call.1} parent=1 // pred_region
      %s19 = ssub.s32 256, 256
      %20 = vsyncadd [#allocation4], %s19
      %s21 = sshll.u32 [#allocation3], 4
      %s22 = int_to_ptr.vmem [resolvable:$true] %s21
      %27 = dma.hbm_to_vmem [thread:$0]  %s0, 256, %s22, [#allocation4], 128, 128, 8
    $region5: #{tpu_custom_call.1} parent=1 // pred_fallthru
      _
    // Predicated region
    $region6: #{tpu_custom_call.1} parent=1 // pred_check
      _
    $region7: #{tpu_custom_call.1} parent=1 // pred_check_branch
      %29 = sbr.rel (0) target = $region9
    $region8: #{tpu_custom_call.1} parent=1 // pred_region
      %s31 = ssub.s32 1024, 1024
      %32 = vsyncadd [#allocation7], %s31
      %s33 = sshll.u32 [#allocation6], 4
      %s34 = int_to_ptr.vmem [resolvable:$true] %s33
      %39 = dma.hbm_to_vmem [thread:$0]  %s1, 1024, %s34, [#allocation7], 256, 256, 16
    $region9: #{tpu_custom_call.1} parent=1 // pred_fallthru
      _
    // Predicated region
    $region10: #{tpu_custom_call.1} parent=1 // pred_check
      _
    $region11: #{tpu_custom_call.1} parent=1 // pred_check_branch
      %41 = sbr.rel (0) target = $region13
    $region12: #{tpu_custom_call.1} parent=1 // pred_region
      _
    $region13: #{tpu_custom_call.1} parent=1 // pred_fallthru
      _
    // Predicated region
    $region14: #{tpu_custom_call.1} parent=1 // pred_check
      _
    $region15: #{tpu_custom_call.1} parent=1 // pred_check_branch
      %43 = sbr.rel (0) target = $region17
    $region16: #{tpu_custom_call.1} parent=1 // pred_region
      _
    $region17: #{tpu_custom_call.1} parent=1 // pred_fallthru
      _
    // Predicated region
    $region18: #{tpu_custom_call.1} parent=1 // pred_check
      _
    $region19: #{tpu_custom_call.1} parent=1 // pred_check_branch
      %45 = sbr.rel (0) target = $region21
    $region20: #{tpu_custom_call.1} parent=1 // pred_region
      %46 = dma.done [#allocation4], 256
    $region21: #{tpu_custom_call.1} parent=1 // pred_fallthru
      _
    // Predicated region
    $region22: #{tpu_custom_call.1} parent=1 // pred_check
      _
    $region23: #{tpu_custom_call.1} parent=1 // pred_check_branch
      %48 = sbr.rel (0) target = $region25
    $region24: #{tpu_custom_call.1} parent=1 // pred_region
      %49 = dma.done [#allocation7], 1024
    $region25: #{tpu_custom_call.1} parent=1 // pred_fallthru
      _
    %v50 = vld [vmem:[#allocation3] sm:$0xff]
    %v51 = vld [vmem:[#allocation3 + $0x8] sm:$0xff]
    %v52 = vld [vmem:[%s2] sm:$0xf]
    %s53 = sld [smem:[#allocation2]]
    %v54 = vld [vmem:[#allocation6] sm:$0xff]
    %v55 = vld [vmem:[#allocation6 + $0x8] sm:$0xff]
    %v56 = vld [vmem:[#allocation6 + $0x10] sm:$0xff]
    %v57 = vld [vmem:[#allocation6 + $0x18] sm:$0xff]
    %v58 = vld [vmem:[#allocation6 + $0x20] sm:$0xff]
    %v59 = vld [vmem:[#allocation6 + $0x28] sm:$0xff]
    %v60 = vld [vmem:[#allocation6 + $0x30] sm:$0xff]
    %v61 = vld [vmem:[#allocation6 + $0x38] sm:$0xff]
    %v63 = vlaneseq
    %v64 = vshrl.u32 %v63, 7
    %v65 = vsub.s32 0, %v64
    %v66 = vrot.slane %v52, %v65
    %v67 = vlaneseq
    %v68 = vshrl.u32 %v67, 7
    %v69 = vsub.s32 2, %v68
    %v70 = vrot.slane %v52, %v69
    %v73 = vlaneseq
    %v74 = vshrl.u32 %v73, 7
    %v75 = vsub.s32 0, %v74
    %v76 = vrot.slane %v66, %v75
    %v77 = vlaneseq
    %v78 = vshrl.u32 %v77, 7
    %v79 = vsub.s32 0, %v78
    %v80 = vrot.slane %v70, %v79
    %vm81 = vcmask 261120
    %v83 = vsel %vm81, %v50, 0
    %v86 = vsel %vm81, %v51, 0
    %88 = vmatprep.subr.mxu0 %v55
    %89 = vmatpush1.msra.mxu0 %v54
    %90 = vmatprep.subr.mxu0 %v57
    %91 = vmatpush1.msra.mxu0 %v56
    %92 = vmatprep.subr.mxu0 %v59
    %93 = vmatpush1.msra.mxu0 %v58
    %94 = vmatprep.subr.mxu0 %v61
    %95 = vmatpush1.msra.mxu0 %v60
    %96 = vmatprep.subr.mxu0 0.0
    %97 = vmatpush1.msra.mxu0 0.0
    %98 = vmatprep.subr.mxu0 0.0
    %99 = vmatpush1.msra.mxu0 0.0
    %100 = vmatprep.subr.mxu0 0.0
    %101 = vmatpush1.msra.mxu0 0.0
    %102 = vmatprep.subr.mxu0 0.0
    %103 = vmatpush1.msra.mxu0 0.0
    %104 = vmatprep.subr.mxu0 0.0
    %105 = vmatpush1.msra.mxu0 0.0
    %106 = vmatprep.subr.mxu0 0.0
    %107 = vmatpush1.msra.mxu0 0.0
    %108 = vmatprep.subr.mxu0 0.0
    %109 = vmatpush1.msra.mxu0 0.0
    %110 = vmatprep.subr.mxu0 0.0
    %111 = vmatpush1.msra.mxu0 0.0
    %112 = vmatprep.subr.mxu0 0.0
    %113 = vmatpush1.msra.mxu0 0.0
    %114 = vmatprep.subr.mxu0 0.0
    %115 = vmatpush1.msra.mxu0 0.0
    %116 = vmatprep.subr.mxu0 0.0
    %117 = vmatpush1.msra.mxu0 0.0
    %118 = vmatprep.subr.mxu0 0.0
    %119 = vmatpush1.msra.mxu0 0.0
    %120 = vmatprep.subr.mxu0 0.0
    %121 = vmatpush1.msra.mxu0 0.0
    %122 = vmatprep.subr.mxu0 0.0
    %123 = vmatpush1.msra.mxu0 0.0
    %124 = vmatprep.subr.mxu0 0.0
    %125 = vmatpush1.msra.mxu0 0.0
    %126 = vmatprep.subr.mxu0 0.0
    %127 = vmatpush1.msra.mxu0 0.0
    %128 = vmatprep.subr.mxu0 0.0
    %129 = vmatpush1.msra.mxu0 0.0
    %130 = vmatprep.subr.mxu0 0.0
    %131 = vmatpush1.msra.mxu0 0.0
    %132 = vmatprep.subr.mxu0 0.0
    %133 = vmatpush1.msra.mxu0 0.0
    %134 = vmatprep.subr.mxu0 0.0
    %135 = vmatpush1.msra.mxu0 0.0
    %136 = vmatprep.subr.mxu0 0.0
    %137 = vmatpush1.msra.mxu0 0.0
    %138 = vmatprep.subr.mxu0 0.0
    %139 = vmatpush1.msra.mxu0 0.0
    %140 = vmatprep.subr.mxu0 0.0
    %141 = vmatpush1.msra.mxu0 0.0
    %142 = vmatprep.subr.mxu0 0.0
    %143 = vmatpush1.msra.mxu0 0.0
    %144 = vmatprep.subr.mxu0 0.0
    %145 = vmatpush1.msra.mxu0 0.0
    %146 = vmatprep.subr.mxu0 0.0
    %147 = vmatpush1.msra.mxu0 0.0
    %148 = vmatprep.subr.mxu0 0.0
    %149 = vmatpush1.msra.mxu0 0.0
    %150 = vmatprep.subr.mxu0 0.0
    %151 = vmatpush1.msra.mxu0 0.0
    %152 = vmatprep.mubr.f32.mxu0 0.0
    %153 = vmatmul.mubr.f32.gmra.mrb[0].mxu0 %v83
    %v154 = vpop.f32.mrb[0].mxu0
    %v155 = vadd.f32 %v76, %v154
    %v156 = vpop.f32.mrb[0].mxu0
    %v157 = vadd.f32 %v80, %v156
    %158 = vmatprep.mubr.f32.mxu0 0.0
    %159 = vmatmul.mubr.f32.gmra.mrb[0].mxu0 %v86
    %v160 = vpop.f32.mrb[0].mxu0
    %v161 = vadd.f32 %v76, %v160
    %v162 = vpop.f32.mrb[0].mxu0
    %v163 = vadd.f32 %v80, %v162
    %164 = vdwg.mxu0
    %v165 = vmax.f32 %v155, 0.0
    %v166 = vmax.f32 %v157, 0.0
    %v167 = vmax.f32 %v161, 0.0
    %v168 = vmax.f32 %v163, 0.0
    %v169 = vlaneseq
    %v170 = vshrl.u32 %v169, 7
    %v171 = vsub.s32 1, %v170
    %v172 = vrot.slane %v52, %v171
    %v173 = vlaneseq
    %v174 = vshrl.u32 %v173, 7
    %v175 = vsub.s32 3, %v174
    %v176 = vrot.slane %v52, %v175
    %v179 = vlaneseq
    %v180 = vshrl.u32 %v179, 7
    %v181 = vsub.s32 1, %v180
    %v182 = vrot.slane %v172, %v181
    %v183 = vlaneseq
    %v184 = vshrl.u32 %v183, 7
    %v185 = vsub.s32 1, %v184
    %v186 = vrot.slane %v176, %v185
    %v187 = vmul.f32 %v165, %v182
    %v188 = vmul.f32 %v166, %v186
    %v189 = vmul.f32 %v167, %v182
    %v190 = vmul.f32 %v168, %v186
    %v191 = vadd.f32 %v187, %v188
    %192 = vadd.xlane.f32.xlu0 %v191
    %v193 = vpop.xlane.xlu0 %192
    %v194 = vadd.f32 %v189, %v190
    %195 = vadd.xlane.f32.xlu0 %v194
    %v196 = vpop.xlane.xlu0 %195
    %v197 = vstv %s53
    %v198 = vadd.f32 %v193, %v197
    %v199 = vadd.f32 %v196, %v197
    %v200 = vxor.u32 %v198, 2147483648
    %v201 = vxor.u32 %v199, 2147483648
    %v202 = vmul.f32 %v200, 1.442695
    %v203 = vpow.pop %v202
    %v204 = vmul.f32 %v201, 1.442695
    %v205 = vpow.pop %v204
    %v206 = vadd.f32 %v203, 1.0
    %v207 = vadd.f32 %v205, 1.0
    %v208 = vrcp.pop %v206
    %v209 = vmul.f32 1.0, %v208
    %v210 = vrcp.pop %v207
    %v211 = vmul.f32 1.0, %v210
    %v212 = vmul.f32 %v50, %v209
    %v213 = vmul.f32 %v51, %v211
    %v214 = vsel %vm81, %v212, 0.0
    %v215 = vrot.slane %v214, 4
    %v216 = vadd.f32 %v214, %v215
    %v217 = vrot.slane %v216, 2
    %v218 = vadd.f32 %v216, %v217
    %v219 = vrot.slane %v218, 1
    %v220 = vadd.f32 %v218, %v219
    %v221 = vsel %vm81, %v213, 0.0
    %v222 = vrot.slane %v221, 4
    %v223 = vadd.f32 %v221, %v222
    %v224 = vrot.slane %v223, 2
    %v225 = vadd.f32 %v223, %v224
    %v226 = vrot.slane %v225, 1
    %v227 = vadd.f32 %v225, %v226
    %vm230 = vcmask 1041409
    %v231 = vsel %vm230, %v227, %v220
    %vm233 = vcmask 254976
    %234 = vst.msk [vmem:[#allocation8] sm:$0x3] %vm233, %v231
    %v237 = vlaneseq
    %v238 = vand.u32 %v237, 127
    %v239 = vlaneseq
    %v240 = vshrl.u32 %v239, 7
    %v241 = vsub.s32 %v238, %v240
    %v242 = vrot.slane %v209, %v241
    %v243 = vlaneseq
    %v244 = vshrl.u32 %v243, 7
    %v245 = vsub.s32 %v238, %v244
    %v246 = vrot.slane %v211, %v245
    %v247 = vsel %vm230, %v246, %v242
    %vm249 = vcmask 58368
    %250 = vst.msk [vmem:[#allocation9] sm:$0x3] %vm249, %v247
    // Predicated region
    $region26: #{tpu_custom_call.1} parent=1 // pred_check
      _
    $region27: #{tpu_custom_call.1} parent=1 // pred_check_branch
      %252 = sbr.rel (0) target = $region29
    $region28: #{tpu_custom_call.1} parent=1 // pred_region
      %s254 = ssub.s32 32, 32
      %255 = vsyncadd [#allocation5], %s254
      %s257 = sshll.u32 [#allocation8], 4
      %s258 = int_to_ptr.vmem [resolvable:$true] %s257
      %260 = dma.vmem_to_hbm [thread:$0]  %s258, 32, %s4, [#allocation5]
    $region29: #{tpu_custom_call.1} parent=1 // pred_fallthru
      _
    // Predicated region
    $region30: #{tpu_custom_call.1} parent=1 // pred_check
      _
    $region31: #{tpu_custom_call.1} parent=1 // pred_check_branch
      %262 = sbr.rel (0) target = $region33
    $region32: #{tpu_custom_call.1} parent=1 // pred_region
      %s264 = ssub.s32 32, 32
      %265 = vsyncadd [#allocation10], %s264
      %s267 = sshll.u32 [#allocation9], 4
      %s268 = int_to_ptr.vmem [resolvable:$true] %s267
      %270 = dma.vmem_to_hbm [thread:$0]  %s268, 32, %s5, [#allocation10]
    $region33: #{tpu_custom_call.1} parent=1 // pred_fallthru
      _
    // Predicated region
    $region34: #{tpu_custom_call.1} parent=1 // pred_check
      _
    $region35: #{tpu_custom_call.1} parent=1 // pred_check_branch
      %272 = sbr.rel (0) target = $region37
    $region36: #{tpu_custom_call.1} parent=1 // pred_region
      %273 = dma.done [#allocation5], 32
    $region37: #{tpu_custom_call.1} parent=1 // pred_fallthru
      _
    // Predicated region
    $region38: #{tpu_custom_call.1} parent=1 // pred_check
      _
    $region39: #{tpu_custom_call.1} parent=1 // pred_check_branch
      %275 = sbr.rel (0) target = $region41
    $region40: #{tpu_custom_call.1} parent=1 // pred_region
      %276 = dma.done [#allocation10], 32
    $region41: #{tpu_custom_call.1} parent=1 // pred_fallthru
      _
    %277 = vsyncpa [#allocation4], 1
    %278 = vsyncpa [#allocation7], 1
    %279 = vsyncpa [#allocation5], 1
    %280 = vsyncpa [#allocation10], 1

</llo_original>
